<compile_context>
chip_gen: v7x
topology: tpu7x:2x2x1
jax: 0.10.0
libtpu: 0.0.40
codegen_flags: <defaults>
</compile_context>

<pallas_src>
import jax
import jax.numpy as jnp
from jax.experimental import pallas as pl
from jax.experimental.pallas import tpu as pltpu


def _resgcn5_kernel(
    x_ref, adj_ref,
    wz_ref, bz_ref,
    w1_ref, b1_ref,
    w2_ref, b2_ref,
    w3_ref, b3_ref,
    w5a_ref, w5b_ref, w5c_ref, w5d_ref, b5_ref,
    o_ref,
):
    x = x_ref[...]
    adj = adj_ref[...]

    def gcn(h, w_ref, b_ref):
        # support = h @ W ; out = adj @ support + b    (kept in this order:
        # second matmul works on the narrow F_out axis)
        support = jnp.dot(h, w_ref[...], preferred_element_type=jnp.float32)
        return jnp.dot(adj, support, preferred_element_type=jnp.float32) + b_ref[...]

    # z = x @ Wz + bz   (plain linear, no adjacency)
    z = jnp.dot(x, wz_ref[...], preferred_element_type=jnp.float32) + bz_ref[...]

    x1 = jnp.maximum(gcn(x, w1_ref, b1_ref), 0.0) + z
    x2 = jnp.maximum(gcn(x1, w2_ref, b2_ref), 0.0) + x1
    x3 = jnp.maximum(gcn(x2, w2_ref, b2_ref), 0.0) + x2   # gc2 reused
    x4 = jnp.maximum(gcn(x3, w3_ref, b3_ref), 0.0) + x3

    # cat(x4, x3, x2, x1) @ W5  ==  x4@W5[0:H] + x3@W5[H:2H] + x2@W5[2H:3H] + x1@W5[3H:4H]
    support5 = (
        jnp.dot(x4, w5a_ref[...], preferred_element_type=jnp.float32)
        + jnp.dot(x3, w5b_ref[...], preferred_element_type=jnp.float32)
        + jnp.dot(x2, w5c_ref[...], preferred_element_type=jnp.float32)
        + jnp.dot(x1, w5d_ref[...], preferred_element_type=jnp.float32)
    )
    x5 = jnp.dot(adj, support5, preferred_element_type=jnp.float32) + b5_ref[...]

    # log_softmax over the class axis (no lane padding -> no masking needed)
    m = jnp.max(x5, axis=-1, keepdims=True)
    s = x5 - m
    lse = jnp.log(jnp.sum(jnp.exp(s), axis=-1, keepdims=True))
    o_ref[...] = (s - lse).astype(o_ref.dtype)


def resgcn5_forward(x, adj, params):
    """Whole ResGCN5 forward as one fused Pallas kernel invocation."""
    n = x.shape[0]
    nclass = params["w5"].shape[1]

    # Split W5 row-wise once (outside the kernel) so the concat is implicit.
    w5a, w5b, w5c, w5d = jnp.split(params["w5"], 4, axis=0)

    args = (
        x, adj,
        params["wz"], params["bz"],
        params["w1"], params["b1"],
        params["w2"], params["b2"],
        params["w3"], params["b3"],
        w5a, w5b, w5c, w5d, params["b5"],
    )

    vmem_spec = pl.BlockSpec(memory_space=pltpu.MemorySpace.VMEM)
    return pl.pallas_call(
        _resgcn5_kernel,
        out_shape=jax.ShapeDtypeStruct((n, nclass), jnp.float32),
        in_specs=[vmem_spec] * len(args),
        out_specs=vmem_spec,
    )(*args)


def resgcn5_reference(x, adj, params):
    """Pure-JAX reference (mirrors the PyTorch forward, eval-mode dropout)."""
    def gcn(h, w, b):
        return adj @ (h @ w) + b

    z = x @ params["wz"] + params["bz"]
    x1 = jax.nn.relu(gcn(x, params["w1"], params["b1"])) + z
    x2 = jax.nn.relu(gcn(x1, params["w2"], params["b2"])) + x1
    x3 = jax.nn.relu(gcn(x2, params["w2"], params["b2"])) + x2
    x4 = jax.nn.relu(gcn(x3, params["w3"], params["b3"])) + x3
    xc = jnp.concatenate([x4, x3, x2, x1], axis=1)
    x5 = gcn(xc, params["w5"], params["b5"])
    return jax.nn.log_softmax(x5, axis=1)


def init_params(key, nfeat, nhid, nclass):
    """uniform(-stdv, stdv) with stdv = 1/sqrt(out_features), as in the module."""
    def uni(k, shape, fout):
        stdv = 1.0 / (fout ** 0.5)
        return jax.random.uniform(k, shape, jnp.float32, -stdv, stdv)

    keys = jax.random.split(key, 10)
    return {
        "wz": uni(keys[0], (nfeat, nhid), nhid),        # module-level Parameter
        "bz": uni(keys[1], (1, nhid), nhid),
        "w1": uni(keys[2], (nfeat, nhid), nhid),        # gc1
        "b1": uni(keys[3], (1, nhid), nhid),
        "w2": uni(keys[4], (nhid, nhid), nhid),         # gc2 (used twice)
        "b2": uni(keys[5], (1, nhid), nhid),
        "w3": uni(keys[6], (nhid, nhid), nhid),         # gc3
        "b3": uni(keys[7], (1, nhid), nhid),
        "w5": uni(keys[8], (4 * nhid, nclass), nclass), # gc5
        "b5": uni(keys[9], (1, nclass), nclass),
    }


def make_adj(key, n):
    """Symmetric, self-looped, row-normalized adjacency (typical GCN input)."""
    a = jax.random.uniform(key, (n, n), jnp.float32)
    a = (a > 0.5).astype(jnp.float32)
    a = jnp.maximum(a, a.T) + jnp.eye(n, dtype=jnp.float32)
    deg = jnp.sum(a, axis=1, keepdims=True)
    return a / deg


if __name__ == "__main__":
    N = 8        # number of graph nodes
    NFEAT = 16
    NHID = 32
    NCLASS = 4

    key = jax.random.PRNGKey(0)
    kx, kadj, kp = jax.random.split(key, 3)

    x = jax.random.normal(kx, (N, NFEAT), jnp.float32)
    adj = make_adj(kadj, N)
    params = init_params(kp, NFEAT, NHID, NCLASS)

    out = jax.block_until_ready(resgcn5_forward(x, adj, params))
    ref = resgcn5_reference(x, adj, params)

    assert out.shape == (N, NCLASS)
    # log_softmax rows should sum to ~1 after exp
    assert bool(jnp.all(jnp.abs(jnp.exp(out).sum(axis=1) - 1.0) < 1e-4))
    # fused kernel must match the pure-JAX reference
    assert bool(jnp.allclose(out, ref, atol=1e-4, rtol=1e-4))

    print("KERNEL_OK")
</pallas_src>

<mosaic_0001>
module attributes {stable_mosaic.version = 11 : i64} {
  func.func @_resgcn5_kernel(%arg0: memref<8x16xf32, #tpu.memory_space<vmem>>, %arg1: memref<8x8xf32, #tpu.memory_space<vmem>>, %arg2: memref<16x32xf32, #tpu.memory_space<vmem>>, %arg3: memref<1x32xf32, #tpu.memory_space<vmem>>, %arg4: memref<16x32xf32, #tpu.memory_space<vmem>>, %arg5: memref<1x32xf32, #tpu.memory_space<vmem>>, %arg6: memref<32x32xf32, #tpu.memory_space<vmem>>, %arg7: memref<1x32xf32, #tpu.memory_space<vmem>>, %arg8: memref<32x32xf32, #tpu.memory_space<vmem>>, %arg9: memref<1x32xf32, #tpu.memory_space<vmem>>, %arg10: memref<32x4xf32, #tpu.memory_space<vmem>>, %arg11: memref<32x4xf32, #tpu.memory_space<vmem>>, %arg12: memref<32x4xf32, #tpu.memory_space<vmem>>, %arg13: memref<32x4xf32, #tpu.memory_space<vmem>>, %arg14: memref<1x4xf32, #tpu.memory_space<vmem>>, %arg15: memref<8x4xf32, #tpu.memory_space<vmem>>) attributes {dimension_semantics = [], scalar_prefetch = 0 : i64, scratch_operands = 0 : i64, tpu.core_type = #tpu.core_type<tc>} {
    %c0 = arith.constant 0 : index
    %c0_0 = arith.constant 0 : index
    %0 = vector.load %arg0[%c0, %c0_0] : memref<8x16xf32, #tpu.memory_space<vmem>>, vector<8x16xf32>
    %c0_1 = arith.constant 0 : index
    %c0_2 = arith.constant 0 : index
    %1 = vector.load %arg1[%c0_1, %c0_2] : memref<8x8xf32, #tpu.memory_space<vmem>>, vector<8x8xf32>
    %c0_3 = arith.constant 0 : index
    %c0_4 = arith.constant 0 : index
    %2 = vector.load %arg2[%c0_3, %c0_4] : memref<16x32xf32, #tpu.memory_space<vmem>>, vector<16x32xf32>
    %cst = arith.constant dense<0.000000e+00> : vector<8x32xf32>
    %3 = tpu.matmul %0, %2, %cst {dimension_numbers = #tpu.dot_dimension_numbers<[1], [0], [0], [1], [0, 0, 1, 1], [], []>} : vector<8x16xf32>, vector<16x32xf32>, vector<8x32xf32> -> vector<8x32xf32>
    %c0_5 = arith.constant 0 : index
    %c0_6 = arith.constant 0 : index
    %4 = vector.load %arg3[%c0_5, %c0_6] : memref<1x32xf32, #tpu.memory_space<vmem>>, vector<1x32xf32>
    %5 = vector.broadcast %4 : vector<1x32xf32> to vector<8x32xf32>
    %6 = arith.addf %3, %5 : vector<8x32xf32>
    %c0_7 = arith.constant 0 : index
    %c0_8 = arith.constant 0 : index
    %7 = vector.load %arg4[%c0_7, %c0_8] : memref<16x32xf32, #tpu.memory_space<vmem>>, vector<16x32xf32>
    %cst_9 = arith.constant dense<0.000000e+00> : vector<8x32xf32>
    %8 = tpu.matmul %0, %7, %cst_9 {dimension_numbers = #tpu.dot_dimension_numbers<[1], [0], [0], [1], [0, 0, 1, 1], [], []>} : vector<8x16xf32>, vector<16x32xf32>, vector<8x32xf32> -> vector<8x32xf32>
    %cst_10 = arith.constant dense<0.000000e+00> : vector<8x32xf32>
    %9 = tpu.matmul %1, %8, %cst_10 {dimension_numbers = #tpu.dot_dimension_numbers<[1], [0], [0], [1], [0, 0, 1, 1], [], []>} : vector<8x8xf32>, vector<8x32xf32>, vector<8x32xf32> -> vector<8x32xf32>
    %c0_11 = arith.constant 0 : index
    %c0_12 = arith.constant 0 : index
    %10 = vector.load %arg5[%c0_11, %c0_12] : memref<1x32xf32, #tpu.memory_space<vmem>>, vector<1x32xf32>
    %11 = vector.broadcast %10 : vector<1x32xf32> to vector<8x32xf32>
    %12 = arith.addf %9, %11 : vector<8x32xf32>
    %cst_13 = arith.constant 0.000000e+00 : f32
    %13 = vector.broadcast %cst_13 : f32 to vector<8x32xf32>
    %14 = arith.maximumf %12, %13 : vector<8x32xf32>
    %15 = arith.addf %14, %6 : vector<8x32xf32>
    %c0_14 = arith.constant 0 : index
    %c0_15 = arith.constant 0 : index
    %16 = vector.load %arg6[%c0_14, %c0_15] : memref<32x32xf32, #tpu.memory_space<vmem>>, vector<32x32xf32>
    %cst_16 = arith.constant dense<0.000000e+00> : vector<8x32xf32>
    %17 = tpu.matmul %15, %16, %cst_16 {dimension_numbers = #tpu.dot_dimension_numbers<[1], [0], [0], [1], [0, 0, 1, 1], [], []>} : vector<8x32xf32>, vector<32x32xf32>, vector<8x32xf32> -> vector<8x32xf32>
    %cst_17 = arith.constant dense<0.000000e+00> : vector<8x32xf32>
    %18 = tpu.matmul %1, %17, %cst_17 {dimension_numbers = #tpu.dot_dimension_numbers<[1], [0], [0], [1], [0, 0, 1, 1], [], []>} : vector<8x8xf32>, vector<8x32xf32>, vector<8x32xf32> -> vector<8x32xf32>
    %c0_18 = arith.constant 0 : index
    %c0_19 = arith.constant 0 : index
    %19 = vector.load %arg7[%c0_18, %c0_19] : memref<1x32xf32, #tpu.memory_space<vmem>>, vector<1x32xf32>
    %20 = vector.broadcast %19 : vector<1x32xf32> to vector<8x32xf32>
    %21 = arith.addf %18, %20 : vector<8x32xf32>
    %cst_20 = arith.constant 0.000000e+00 : f32
    %22 = vector.broadcast %cst_20 : f32 to vector<8x32xf32>
    %23 = arith.maximumf %21, %22 : vector<8x32xf32>
    %24 = arith.addf %23, %15 : vector<8x32xf32>
    %c0_21 = arith.constant 0 : index
    %c0_22 = arith.constant 0 : index
    %25 = vector.load %arg6[%c0_21, %c0_22] : memref<32x32xf32, #tpu.memory_space<vmem>>, vector<32x32xf32>
    %cst_23 = arith.constant dense<0.000000e+00> : vector<8x32xf32>
    %26 = tpu.matmul %24, %25, %cst_23 {dimension_numbers = #tpu.dot_dimension_numbers<[1], [0], [0], [1], [0, 0, 1, 1], [], []>} : vector<8x32xf32>, vector<32x32xf32>, vector<8x32xf32> -> vector<8x32xf32>
    %cst_24 = arith.constant dense<0.000000e+00> : vector<8x32xf32>
    %27 = tpu.matmul %1, %26, %cst_24 {dimension_numbers = #tpu.dot_dimension_numbers<[1], [0], [0], [1], [0, 0, 1, 1], [], []>} : vector<8x8xf32>, vector<8x32xf32>, vector<8x32xf32> -> vector<8x32xf32>
    %c0_25 = arith.constant 0 : index
    %c0_26 = arith.constant 0 : index
    %28 = vector.load %arg7[%c0_25, %c0_26] : memref<1x32xf32, #tpu.memory_space<vmem>>, vector<1x32xf32>
    %29 = vector.broadcast %28 : vector<1x32xf32> to vector<8x32xf32>
    %30 = arith.addf %27, %29 : vector<8x32xf32>
    %cst_27 = arith.constant 0.000000e+00 : f32
    %31 = vector.broadcast %cst_27 : f32 to vector<8x32xf32>
    %32 = arith.maximumf %30, %31 : vector<8x32xf32>
    %33 = arith.addf %32, %24 : vector<8x32xf32>
    %c0_28 = arith.constant 0 : index
    %c0_29 = arith.constant 0 : index
    %34 = vector.load %arg8[%c0_28, %c0_29] : memref<32x32xf32, #tpu.memory_space<vmem>>, vector<32x32xf32>
    %cst_30 = arith.constant dense<0.000000e+00> : vector<8x32xf32>
    %35 = tpu.matmul %33, %34, %cst_30 {dimension_numbers = #tpu.dot_dimension_numbers<[1], [0], [0], [1], [0, 0, 1, 1], [], []>} : vector<8x32xf32>, vector<32x32xf32>, vector<8x32xf32> -> vector<8x32xf32>
    %cst_31 = arith.constant dense<0.000000e+00> : vector<8x32xf32>
    %36 = tpu.matmul %1, %35, %cst_31 {dimension_numbers = #tpu.dot_dimension_numbers<[1], [0], [0], [1], [0, 0, 1, 1], [], []>} : vector<8x8xf32>, vector<8x32xf32>, vector<8x32xf32> -> vector<8x32xf32>
    %c0_32 = arith.constant 0 : index
    %c0_33 = arith.constant 0 : index
    %37 = vector.load %arg9[%c0_32, %c0_33] : memref<1x32xf32, #tpu.memory_space<vmem>>, vector<1x32xf32>
    %38 = vector.broadcast %37 : vector<1x32xf32> to vector<8x32xf32>
    %39 = arith.addf %36, %38 : vector<8x32xf32>
    %cst_34 = arith.constant 0.000000e+00 : f32
    %40 = vector.broadcast %cst_34 : f32 to vector<8x32xf32>
    %41 = arith.maximumf %39, %40 : vector<8x32xf32>
    %42 = arith.addf %41, %33 : vector<8x32xf32>
    %c0_35 = arith.constant 0 : index
    %c0_36 = arith.constant 0 : index
    %43 = vector.load %arg10[%c0_35, %c0_36] : memref<32x4xf32, #tpu.memory_space<vmem>>, vector<32x4xf32>
    %cst_37 = arith.constant dense<0.000000e+00> : vector<8x4xf32>
    %44 = tpu.matmul %42, %43, %cst_37 {dimension_numbers = #tpu.dot_dimension_numbers<[1], [0], [0], [1], [0, 0, 1, 1], [], []>} : vector<8x32xf32>, vector<32x4xf32>, vector<8x4xf32> -> vector<8x4xf32>
    %c0_38 = arith.constant 0 : index
    %c0_39 = arith.constant 0 : index
    %45 = vector.load %arg11[%c0_38, %c0_39] : memref<32x4xf32, #tpu.memory_space<vmem>>, vector<32x4xf32>
    %cst_40 = arith.constant dense<0.000000e+00> : vector<8x4xf32>
    %46 = tpu.matmul %33, %45, %cst_40 {dimension_numbers = #tpu.dot_dimension_numbers<[1], [0], [0], [1], [0, 0, 1, 1], [], []>} : vector<8x32xf32>, vector<32x4xf32>, vector<8x4xf32> -> vector<8x4xf32>
    %47 = arith.addf %44, %46 : vector<8x4xf32>
    %c0_41 = arith.constant 0 : index
    %c0_42 = arith.constant 0 : index
    %48 = vector.load %arg12[%c0_41, %c0_42] : memref<32x4xf32, #tpu.memory_space<vmem>>, vector<32x4xf32>
    %cst_43 = arith.constant dense<0.000000e+00> : vector<8x4xf32>
    %49 = tpu.matmul %24, %48, %cst_43 {dimension_numbers = #tpu.dot_dimension_numbers<[1], [0], [0], [1], [0, 0, 1, 1], [], []>} : vector<8x32xf32>, vector<32x4xf32>, vector<8x4xf32> -> vector<8x4xf32>
    %50 = arith.addf %47, %49 : vector<8x4xf32>
    %c0_44 = arith.constant 0 : index
    %c0_45 = arith.constant 0 : index
    %51 = vector.load %arg13[%c0_44, %c0_45] : memref<32x4xf32, #tpu.memory_space<vmem>>, vector<32x4xf32>
    %cst_46 = arith.constant dense<0.000000e+00> : vector<8x4xf32>
    %52 = tpu.matmul %15, %51, %cst_46 {dimension_numbers = #tpu.dot_dimension_numbers<[1], [0], [0], [1], [0, 0, 1, 1], [], []>} : vector<8x32xf32>, vector<32x4xf32>, vector<8x4xf32> -> vector<8x4xf32>
    %53 = arith.addf %50, %52 : vector<8x4xf32>
    %cst_47 = arith.constant dense<0.000000e+00> : vector<8x4xf32>
    %54 = tpu.matmul %1, %53, %cst_47 {dimension_numbers = #tpu.dot_dimension_numbers<[1], [0], [0], [1], [0, 0, 1, 1], [], []>} : vector<8x8xf32>, vector<8x4xf32>, vector<8x4xf32> -> vector<8x4xf32>
    %c0_48 = arith.constant 0 : index
    %c0_49 = arith.constant 0 : index
    %55 = vector.load %arg14[%c0_48, %c0_49] : memref<1x4xf32, #tpu.memory_space<vmem>>, vector<1x4xf32>
    %56 = vector.broadcast %55 : vector<1x4xf32> to vector<8x4xf32>
    %57 = arith.addf %54, %56 : vector<8x4xf32>
    %cst_50 = arith.constant dense<0xFF800000> : vector<8xf32>
    %58 = vector.multi_reduction <maximumf>, %57, %cst_50 [1] : vector<8x4xf32> to vector<8xf32>
    %59 = vector.shape_cast %58 : vector<8xf32> to vector<8x1xf32>
    %60 = vector.broadcast %59 : vector<8x1xf32> to vector<8x4xf32>
    %61 = arith.subf %57, %60 : vector<8x4xf32>
    %62 = math.exp %61 : vector<8x4xf32>
    %cst_51 = arith.constant dense<0.000000e+00> : vector<8xf32>
    %63 = vector.multi_reduction <add>, %62, %cst_51 [1] : vector<8x4xf32> to vector<8xf32>
    %64 = vector.shape_cast %63 : vector<8xf32> to vector<8x1xf32>
    %65 = math.log %64 : vector<8x1xf32>
    %66 = vector.broadcast %65 : vector<8x1xf32> to vector<8x4xf32>
    %67 = arith.subf %61, %66 : vector<8x4xf32>
    %c0_52 = arith.constant 0 : index
    %c0_53 = arith.constant 0 : index
    %68 = vector.load %arg15[%c0_52, %c0_53] : memref<8x4xf32, #tpu.memory_space<vmem>>, vector<8x4xf32>
    tpu.vector_store %arg15[%c0_52, %c0_53], %67 {strides = array<i32>} : memref<8x4xf32, #tpu.memory_space<vmem>>, vector<8x4xf32>,
    return
  }
}

</mosaic_0001>

<llo_original>
// kernel: tpu_custom_call.1
$region0: #{tpu_custom_call.1}
  #allocation0 [shape = 'u32[]', space=smem, size = 0x4, offset = 0x4, fixed_abs, tag = 'smem constant byte address 0x4 - core index']
  #allocation1 [shape = 'u32[144,128]{1,0:T(1,128)}', space=vmem, size = 0x12000, scoped, tag = 'internal scratch']
  %s0 = inlined_call_operand.vmem [shape: f32[8,16], index: 0, kind: input, shape index: {}]
  %s1 = inlined_call_operand.vmem [shape: f32[8,8], index: 1, kind: input, shape index: {}]
  %s2 = inlined_call_operand.vmem [shape: f32[16,32], index: 2, kind: input, shape index: {}]
  %s3 = inlined_call_operand.vmem [shape: f32[1,32], index: 3, kind: input, shape index: {}]
  %s4 = inlined_call_operand.vmem [shape: f32[16,32], index: 4, kind: input, shape index: {}]
  %s5 = inlined_call_operand.vmem [shape: f32[1,32], index: 5, kind: input, shape index: {}]
  %s6 = inlined_call_operand.vmem [shape: f32[32,32], index: 6, kind: input, shape index: {}]
  %s7 = inlined_call_operand.vmem [shape: f32[1,32], index: 7, kind: input, shape index: {}]
  %s8 = inlined_call_operand.vmem [shape: f32[32,32], index: 8, kind: input, shape index: {}]
  %s9 = inlined_call_operand.vmem [shape: f32[1,32], index: 9, kind: input, shape index: {}]
  %s10 = inlined_call_operand.vmem [shape: f32[32,4], index: 10, kind: input, shape index: {}]
  %s11 = inlined_call_operand.vmem [shape: f32[32,4], index: 11, kind: input, shape index: {}]
  %s12 = inlined_call_operand.vmem [shape: f32[32,4], index: 12, kind: input, shape index: {}]
  %s13 = inlined_call_operand.vmem [shape: f32[32,4], index: 13, kind: input, shape index: {}]
  %s14 = inlined_call_operand.vmem [shape: f32[1,4], index: 14, kind: input, shape index: {}]
  %s15 = inlined_call_operand.vmem [shape: f32[8,4], index: 15, kind: output, shape index: {}]
  %s16 = sld [smem:[#allocation0]]
  $region70: #{tpu_custom_call.1} parent=0
    _
  %s18 = ssub.s32 1, %s16
  %s19 = scalar_select 0, %s18, %s16
  // Predicated region
  $region2: #{tpu_custom_call.1} parent=0 // pred_check
    _
  $region3: #{tpu_custom_call.1} parent=0 // pred_check_branch
    %21 = sbr.rel (0) target = $region5
  $region4: #{tpu_custom_call.1} parent=0 // pred_region
    _
  $region5: #{tpu_custom_call.1} parent=0 // pred_fallthru
    _
  // Predicated region
  $region6: #{tpu_custom_call.1} parent=0 // pred_check
    _
  $region7: #{tpu_custom_call.1} parent=0 // pred_check_branch
    %23 = sbr.rel (0) target = $region9
  $region8: #{tpu_custom_call.1} parent=0 // pred_region
    _
  $region9: #{tpu_custom_call.1} parent=0 // pred_fallthru
    _
  // Predicated region
  $region10: #{tpu_custom_call.1} parent=0 // pred_check
    _
  $region11: #{tpu_custom_call.1} parent=0 // pred_check_branch
    %25 = sbr.rel (0) target = $region13
  $region12: #{tpu_custom_call.1} parent=0 // pred_region
    _
  $region13: #{tpu_custom_call.1} parent=0 // pred_fallthru
    _
  // Predicated region
  $region14: #{tpu_custom_call.1} parent=0 // pred_check
    _
  $region15: #{tpu_custom_call.1} parent=0 // pred_check_branch
    %27 = sbr.rel (0) target = $region17
  $region16: #{tpu_custom_call.1} parent=0 // pred_region
    _
  $region17: #{tpu_custom_call.1} parent=0 // pred_fallthru
    _
  // Predicated region
  $region18: #{tpu_custom_call.1} parent=0 // pred_check
    _
  $region19: #{tpu_custom_call.1} parent=0 // pred_check_branch
    %29 = sbr.rel (0) target = $region21
  $region20: #{tpu_custom_call.1} parent=0 // pred_region
    _
  $region21: #{tpu_custom_call.1} parent=0 // pred_fallthru
    _
  // Predicated region
  $region22: #{tpu_custom_call.1} parent=0 // pred_check
    _
  $region23: #{tpu_custom_call.1} parent=0 // pred_check_branch
    %31 = sbr.rel (0) target = $region25
  $region24: #{tpu_custom_call.1} parent=0 // pred_region
    _
  $region25: #{tpu_custom_call.1} parent=0 // pred_fallthru
    _
  // Predicated region
  $region26: #{tpu_custom_call.1} parent=0 // pred_check
    _
  $region27: #{tpu_custom_call.1} parent=0 // pred_check_branch
    %33 = sbr.rel (0) target = $region29
  $region28: #{tpu_custom_call.1} parent=0 // pred_region
    _
  $region29: #{tpu_custom_call.1} parent=0 // pred_fallthru
    _
  // Predicated region
  $region30: #{tpu_custom_call.1} parent=0 // pred_check
    _
  $region31: #{tpu_custom_call.1} parent=0 // pred_check_branch
    %35 = sbr.rel (0) target = $region33
  $region32: #{tpu_custom_call.1} parent=0 // pred_region
    _
  $region33: #{tpu_custom_call.1} parent=0 // pred_fallthru
    _
  // Predicated region
  $region34: #{tpu_custom_call.1} parent=0 // pred_check
    _
  $region35: #{tpu_custom_call.1} parent=0 // pred_check_branch
    %37 = sbr.rel (0) target = $region37
  $region36: #{tpu_custom_call.1} parent=0 // pred_region
    _
  $region37: #{tpu_custom_call.1} parent=0 // pred_fallthru
    _
  // Predicated region
  $region38: #{tpu_custom_call.1} parent=0 // pred_check
    _
  $region39: #{tpu_custom_call.1} parent=0 // pred_check_branch
    %39 = sbr.rel (0) target = $region41
  $region40: #{tpu_custom_call.1} parent=0 // pred_region
    _
  $region41: #{tpu_custom_call.1} parent=0 // pred_fallthru
    _
  // Predicated region
  $region42: #{tpu_custom_call.1} parent=0 // pred_check
    _
  $region43: #{tpu_custom_call.1} parent=0 // pred_check_branch
    %41 = sbr.rel (0) target = $region45
  $region44: #{tpu_custom_call.1} parent=0 // pred_region
    _
  $region45: #{tpu_custom_call.1} parent=0 // pred_fallthru
    _
  // Predicated region
  $region46: #{tpu_custom_call.1} parent=0 // pred_check
    _
  $region47: #{tpu_custom_call.1} parent=0 // pred_check_branch
    %43 = sbr.rel (0) target = $region49
  $region48: #{tpu_custom_call.1} parent=0 // pred_region
    _
  $region49: #{tpu_custom_call.1} parent=0 // pred_fallthru
    _
  // Predicated region
  $region50: #{tpu_custom_call.1} parent=0 // pred_check
    _
  $region51: #{tpu_custom_call.1} parent=0 // pred_check_branch
    %45 = sbr.rel (0) target = $region53
  $region52: #{tpu_custom_call.1} parent=0 // pred_region
    _
  $region53: #{tpu_custom_call.1} parent=0 // pred_fallthru
    _
  // Predicated region
  $region54: #{tpu_custom_call.1} parent=0 // pred_check
    _
  $region55: #{tpu_custom_call.1} parent=0 // pred_check_branch
    %47 = sbr.rel (0) target = $region57
  $region56: #{tpu_custom_call.1} parent=0 // pred_region
    _
  $region57: #{tpu_custom_call.1} parent=0 // pred_fallthru
    _
  // Predicated region
  $region58: #{tpu_custom_call.1} parent=0 // pred_check
    _
  $region59: #{tpu_custom_call.1} parent=0 // pred_check_branch
    %49 = sbr.rel (0) target = $region61
  $region60: #{tpu_custom_call.1} parent=0 // pred_region
    _
  $region61: #{tpu_custom_call.1} parent=0 // pred_fallthru
    _
  %v50 = vld [vmem:[%s0] sm:$0xff]
  %v51 = vld [vmem:[%s1] sm:$0xff]
  %v52 = vld [vmem:[%s2] sm:$0xff]
  %v53 = vld [vmem:[%s2 + $0x8] sm:$0xff]
  %v54 = vld [vmem:[%s3] sm:$0x1]
  %v56 = vlaneseq
  %v57 = vshrl.u32 %v56, 7
  %v58 = vsub.s32 0, %v57
  %v59 = vrot.slane %v54, %v58
  %vm61 = vcmask 130048
  %v63 = vsel %vm61, %v50, 0
  %65 = vmatprep.subr.mxu0 0.0
  %66 = vmatpush1.msra.mxu0 %v52
  %67 = vmatprep.subr.mxu0 0.0
  %68 = vmatpush1.msra.mxu0 %v53
  %69 = vmatprep.subr.mxu0 0.0
  %70 = vmatpush1.msra.mxu0 0.0
  %71 = vmatprep.subr.mxu0 0.0
  %72 = vmatpush1.msra.mxu0 0.0
  %73 = vmatprep.subr.mxu0 0.0
  %74 = vmatpush1.msra.mxu0 0.0
  %75 = vmatprep.subr.mxu0 0.0
  %76 = vmatpush1.msra.mxu0 0.0
  %77 = vmatprep.subr.mxu0 0.0
  %78 = vmatpush1.msra.mxu0 0.0
  %79 = vmatprep.subr.mxu0 0.0
  %80 = vmatpush1.msra.mxu0 0.0
  %81 = vmatprep.subr.mxu0 0.0
  %82 = vmatpush1.msra.mxu0 0.0
  %83 = vmatprep.subr.mxu0 0.0
  %84 = vmatpush1.msra.mxu0 0.0
  %85 = vmatprep.subr.mxu0 0.0
  %86 = vmatpush1.msra.mxu0 0.0
  %87 = vmatprep.subr.mxu0 0.0
  %88 = vmatpush1.msra.mxu0 0.0
  %89 = vmatprep.subr.mxu0 0.0
  %90 = vmatpush1.msra.mxu0 0.0
  %91 = vmatprep.subr.mxu0 0.0
  %92 = vmatpush1.msra.mxu0 0.0
  %93 = vmatprep.subr.mxu0 0.0
  %94 = vmatpush1.msra.mxu0 0.0
  %95 = vmatprep.subr.mxu0 0.0
  %96 = vmatpush1.msra.mxu0 0.0
  %97 = vmatprep.subr.mxu0 0.0
  %98 = vmatpush1.msra.mxu0 0.0
  %99 = vmatprep.subr.mxu0 0.0
  %100 = vmatpush1.msra.mxu0 0.0
  %101 = vmatprep.subr.mxu0 0.0
  %102 = vmatpush1.msra.mxu0 0.0
  %103 = vmatprep.subr.mxu0 0.0
  %104 = vmatpush1.msra.mxu0 0.0
  %105 = vmatprep.subr.mxu0 0.0
  %106 = vmatpush1.msra.mxu0 0.0
  %107 = vmatprep.subr.mxu0 0.0
  %108 = vmatpush1.msra.mxu0 0.0
  %109 = vmatprep.subr.mxu0 0.0
  %110 = vmatpush1.msra.mxu0 0.0
  %111 = vmatprep.subr.mxu0 0.0
  %112 = vmatpush1.msra.mxu0 0.0
  %113 = vmatprep.subr.mxu0 0.0
  %114 = vmatpush1.msra.mxu0 0.0
  %115 = vmatprep.subr.mxu0 0.0
  %116 = vmatpush1.msra.mxu0 0.0
  %117 = vmatprep.subr.mxu0 0.0
  %118 = vmatpush1.msra.mxu0 0.0
  %119 = vmatprep.subr.mxu0 0.0
  %120 = vmatpush1.msra.mxu0 0.0
  %121 = vmatprep.subr.mxu0 0.0
  %122 = vmatpush1.msra.mxu0 0.0
  %123 = vmatprep.subr.mxu0 0.0
  %124 = vmatpush1.msra.mxu0 0.0
  %125 = vmatprep.subr.mxu0 0.0
  %126 = vmatpush1.msra.mxu0 0.0
  %127 = vmatprep.subr.mxu0 0.0
  %128 = vmatpush1.msra.mxu0 0.0
  %129 = vmatprep.mubr.f32.mxu0 0.0
  %130 = vmatmul.mubr.f32.gmra.mrb[0].mxu0 %v63
  %v131 = vpop.f32.mrb[0].mxu0
  %v132 = vadd.f32 %v59, %v131
  %v133 = vpop.f32.mrb[0].mxu0
  %134 = vdwg.mxu0
  %v135 = vld [vmem:[%s4] sm:$0xff]
  %v136 = vld [vmem:[%s4 + $0x8] sm:$0xff]
  %137 = vmatprep.subr.mxu0 0.0
  %138 = vmatpush1.msra.mxu0 %v135
  %139 = vmatprep.subr.mxu0 0.0
  %140 = vmatpush1.msra.mxu0 %v136
  %141 = vmatprep.subr.mxu0 0.0
  %142 = vmatpush1.msra.mxu0 0.0
  %143 = vmatprep.subr.mxu0 0.0
  %144 = vmatpush1.msra.mxu0 0.0
  %145 = vmatprep.subr.mxu0 0.0
  %146 = vmatpush1.msra.mxu0 0.0
  %147 = vmatprep.subr.mxu0 0.0
  %148 = vmatpush1.msra.mxu0 0.0
  %149 = vmatprep.subr.mxu0 0.0
  %150 = vmatpush1.msra.mxu0 0.0
  %151 = vmatprep.subr.mxu0 0.0
  %152 = vmatpush1.msra.mxu0 0.0
  %153 = vmatprep.subr.mxu0 0.0
  %154 = vmatpush1.msra.mxu0 0.0
  %155 = vmatprep.subr.mxu0 0.0
  %156 = vmatpush1.msra.mxu0 0.0
  %157 = vmatprep.subr.mxu0 0.0
  %158 = vmatpush1.msra.mxu0 0.0
  %159 = vmatprep.subr.mxu0 0.0
  %160 = vmatpush1.msra.mxu0 0.0
  %161 = vmatprep.subr.mxu0 0.0
  %162 = vmatpush1.msra.mxu0 0.0
  %163 = vmatprep.subr.mxu0 0.0
  %164 = vmatpush1.msra.mxu0 0.0
  %165 = vmatprep.subr.mxu0 0.0
  %166 = vmatpush1.msra.mxu0 0.0
  %167 = vmatprep.subr.mxu0 0.0
  %168 = vmatpush1.msra.mxu0 0.0
  %169 = vmatprep.subr.mxu0 0.0
  %170 = vmatpush1.msra.mxu0 0.0
  %171 = vmatprep.subr.mxu0 0.0
  %172 = vmatpush1.msra.mxu0 0.0
  %173 = vmatprep.subr.mxu0 0.0
  %174 = vmatpush1.msra.mxu0 0.0
  %175 = vmatprep.subr.mxu0 0.0
  %176 = vmatpush1.msra.mxu0 0.0
  %177 = vmatprep.subr.mxu0 0.0
  %178 = vmatpush1.msra.mxu0 0.0
  %179 = vmatprep.subr.mxu0 0.0
  %180 = vmatpush1.msra.mxu0 0.0
  %181 = vmatprep.subr.mxu0 0.0
  %182 = vmatpush1.msra.mxu0 0.0
  %183 = vmatprep.subr.mxu0 0.0
  %184 = vmatpush1.msra.mxu0 0.0
  %185 = vmatprep.subr.mxu0 0.0
  %186 = vmatpush1.msra.mxu0 0.0
  %187 = vmatprep.subr.mxu0 0.0
  %188 = vmatpush1.msra.mxu0 0.0
  %189 = vmatprep.subr.mxu0 0.0
  %190 = vmatpush1.msra.mxu0 0.0
  %191 = vmatprep.subr.mxu0 0.0
  %192 = vmatpush1.msra.mxu0 0.0
  %193 = vmatprep.subr.mxu0 0.0
  %194 = vmatpush1.msra.mxu0 0.0
  %195 = vmatprep.subr.mxu0 0.0
  %196 = vmatpush1.msra.mxu0 0.0
  %197 = vmatprep.subr.mxu0 0.0
  %198 = vmatpush1.msra.mxu0 0.0
  %199 = vmatprep.subr.mxu0 0.0
  %200 = vmatpush1.msra.mxu0 0.0
  %201 = vmatprep.mubr.f32.mxu0 0.0
  %202 = vmatmul.mubr.f32.gmra.mrb[0].mxu0 %v63
  %v203 = vpop.f32.mrb[0].mxu0
  %v204 = vadd.f32 0.0, %v203
  %v205 = vpop.f32.mrb[0].mxu0
  %206 = vdwg.mxu0
  %v207 = vld [vmem:[%s5] sm:$0x1]
  %v209 = vlaneseq
  %v210 = vshrl.u32 %v209, 7
  %v211 = vsub.s32 0, %v210
  %v212 = vrot.slane %v207, %v211
  %vm214 = vcmask 64512
  %v216 = vsel %vm214, %v51, 0
  %218 = vmatprep.subr.mxu0 0.0
  %219 = vmatpush1.msra.mxu0 %v204
  %220 = vmatprep.subr.mxu0 0.0
  %221 = vmatpush1.msra.mxu0 0.0
  %222 = vmatprep.subr.mxu0 0.0
  %223 = vmatpush1.msra.mxu0 0.0
  %224 = vmatprep.subr.mxu0 0.0
  %225 = vmatpush1.msra.mxu0 0.0
  %226 = vmatprep.subr.mxu0 0.0
  %227 = vmatpush1.msra.mxu0 0.0
  %228 = vmatprep.subr.mxu0 0.0
  %229 = vmatpush1.msra.mxu0 0.0
  %230 = vmatprep.subr.mxu0 0.0
  %231 = vmatpush1.msra.mxu0 0.0
  %232 = vmatprep.subr.mxu0 0.0
  %233 = vmatpush1.msra.mxu0 0.0
  %234 = vmatprep.subr.mxu0 0.0
  %235 = vmatpush1.msra.mxu0 0.0
  %236 = vmatprep.subr.mxu0 0.0
  %237 = vmatpush1.msra.mxu0 0.0
  %238 = vmatprep.subr.mxu0 0.0
  %239 = vmatpush1.msra.mxu0 0.0
  %240 = vmatprep.subr.mxu0 0.0
  %241 = vmatpush1.msra.mxu0 0.0
  %242 = vmatprep.subr.mxu0 0.0
  %243 = vmatpush1.msra.mxu0 0.0
  %244 = vmatprep.subr.mxu0 0.0
  %245 = vmatpush1.msra.mxu0 0.0
  %246 = vmatprep.subr.mxu0 0.0
  %247 = vmatpush1.msra.mxu0 0.0
  %248 = vmatprep.subr.mxu0 0.0
  %249 = vmatpush1.msra.mxu0 0.0
  %250 = vmatprep.subr.mxu0 0.0
  %251 = vmatpush1.msra.mxu0 0.0
  %252 = vmatprep.subr.mxu0 0.0
  %253 = vmatpush1.msra.mxu0 0.0
  %254 = vmatprep.subr.mxu0 0.0
  %255 = vmatpush1.msra.mxu0 0.0
  %256 = vmatprep.subr.mxu0 0.0
  %257 = vmatpush1.msra.mxu0 0.0
  %258 = vmatprep.subr.mxu0 0.0
  %259 = vmatpush1.msra.mxu0 0.0
  %260 = vmatprep.subr.mxu0 0.0
  %261 = vmatpush1.msra.mxu0 0.0
  %262 = vmatprep.subr.mxu0 0.0
  %263 = vmatpush1.msra.mxu0 0.0
  %264 = vmatprep.subr.mxu0 0.0
  %265 = vmatpush1.msra.mxu0 0.0
  %266 = vmatprep.subr.mxu0 0.0
  %267 = vmatpush1.msra.mxu0 0.0
  %268 = vmatprep.subr.mxu0 0.0
  %269 = vmatpush1.msra.mxu0 0.0
  %270 = vmatprep.subr.mxu0 0.0
  %271 = vmatpush1.msra.mxu0 0.0
  %272 = vmatprep.subr.mxu0 0.0
  %273 = vmatpush1.msra.mxu0 0.0
  %274 = vmatprep.subr.mxu0 0.0
  %275 = vmatpush1.msra.mxu0 0.0
  %276 = vmatprep.subr.mxu0 0.0
  %277 = vmatpush1.msra.mxu0 0.0
  %278 = vmatprep.subr.mxu0 0.0
  %279 = vmatpush1.msra.mxu0 0.0
  %280 = vmatprep.subr.mxu0 0.0
  %281 = vmatpush1.msra.mxu0 0.0
  %282 = vmatprep.mubr.f32.mxu0 0.0
  %283 = vmatmul.mubr.f32.gmra.mrb[0].mxu0 %v216
  %v284 = vpop.f32.mrb[0].mxu0
  %v285 = vadd.f32 %v212, %v284
  %v286 = vpop.f32.mrb[0].mxu0
  %287 = vdwg.mxu0
  %v288 = vmax.f32 %v285, 0.0
  %v289 = vadd.f32 %v288, %v132
  %v290 = vld [vmem:[%s6] sm:$0xff]
  %v291 = vld [vmem:[%s6 + $0x8] sm:$0xff]
  %v292 = vld [vmem:[%s6 + $0x10] sm:$0xff]
  %v293 = vld [vmem:[%s6 + $0x18] sm:$0xff]
  %vm294 = vcmask 261120
  %v296 = vsel %vm294, %v289, 0
  %298 = vmatprep.subr.mxu0 0.0
  %299 = vmatpush1.msra.mxu0 %v290
  %300 = vmatprep.subr.mxu0 0.0
  %301 = vmatpush1.msra.mxu0 %v291
  %302 = vmatprep.subr.mxu0 0.0
  %303 = vmatpush1.msra.mxu0 %v292
  %304 = vmatprep.subr.mxu0 0.0
  %305 = vmatpush1.msra.mxu0 %v293
  %306 = vmatprep.subr.mxu0 0.0
  %307 = vmatpush1.msra.mxu0 0.0
  %308 = vmatprep.subr.mxu0 0.0
  %309 = vmatpush1.msra.mxu0 0.0
  %310 = vmatprep.subr.mxu0 0.0
  %311 = vmatpush1.msra.mxu0 0.0
  %312 = vmatprep.subr.mxu0 0.0
  %313 = vmatpush1.msra.mxu0 0.0
  %314 = vmatprep.subr.mxu0 0.0
  %315 = vmatpush1.msra.mxu0 0.0
  %316 = vmatprep.subr.mxu0 0.0
  %317 = vmatpush1.msra.mxu0 0.0
  %318 = vmatprep.subr.mxu0 0.0
  %319 = vmatpush1.msra.mxu0 0.0
  %320 = vmatprep.subr.mxu0 0.0
  %321 = vmatpush1.msra.mxu0 0.0
  %322 = vmatprep.subr.mxu0 0.0
  %323 = vmatpush1.msra.mxu0 0.0
  %324 = vmatprep.subr.mxu0 0.0
  %325 = vmatpush1.msra.mxu0 0.0
  %326 = vmatprep.subr.mxu0 0.0
  %327 = vmatpush1.msra.mxu0 0.0
  %328 = vmatprep.subr.mxu0 0.0
  %329 = vmatpush1.msra.mxu0 0.0
  %330 = vmatprep.subr.mxu0 0.0
  %331 = vmatpush1.msra.mxu0 0.0
  %332 = vmatprep.subr.mxu0 0.0
  %333 = vmatpush1.msra.mxu0 0.0
  %334 = vmatprep.subr.mxu0 0.0
  %335 = vmatpush1.msra.mxu0 0.0
  %336 = vmatprep.subr.mxu0 0.0
  %337 = vmatpush1.msra.mxu0 0.0
  %338 = vmatprep.subr.mxu0 0.0
  %339 = vmatpush1.msra.mxu0 0.0
  %340 = vmatprep.subr.mxu0 0.0
  %341 = vmatpush1.msra.mxu0 0.0
  %342 = vmatprep.subr.mxu0 0.0
  %343 = vmatpush1.msra.mxu0 0.0
  %344 = vmatprep.subr.mxu0 0.0
  %345 = vmatpush1.msra.mxu0 0.0
  %346 = vmatprep.subr.mxu0 0.0
  %347 = vmatpush1.msra.mxu0 0.0
  %348 = vmatprep.subr.mxu0 0.0
  %349 = vmatpush1.msra.mxu0 0.0
  %350 = vmatprep.subr.mxu0 0.0
  %351 = vmatpush1.msra.mxu0 0.0
  %352 = vmatprep.subr.mxu0 0.0
  %353 = vmatpush1.msra.mxu0 0.0
  %354 = vmatprep.subr.mxu0 0.0
  %355 = vmatpush1.msra.mxu0 0.0
  %356 = vmatprep.subr.mxu0 0.0
  %357 = vmatpush1.msra.mxu0 0.0
  %358 = vmatprep.subr.mxu0 0.0
  %359 = vmatpush1.msra.mxu0 0.0
  %360 = vmatprep.subr.mxu0 0.0
  %361 = vmatpush1.msra.mxu0 0.0
  %362 = vmatprep.mubr.f32.mxu0 0.0
  %363 = vmatmul.mubr.f32.gmra.mrb[0].mxu0 %v296
  %v364 = vpop.f32.mrb[0].mxu0
  %v365 = vadd.f32 0.0, %v364
  %v366 = vpop.f32.mrb[0].mxu0
  %367 = vdwg.mxu0
  %v368 = vld [vmem:[%s7] sm:$0x1]
  %v370 = vlaneseq
  %v371 = vshrl.u32 %v370, 7
  %v372 = vsub.s32 0, %v371
  %v373 = vrot.slane %v368, %v372
  %375 = vmatprep.subr.mxu0 0.0
  %376 = vmatpush1.msra.mxu0 %v365
  %377 = vmatprep.subr.mxu0 0.0
  %378 = vmatpush1.msra.mxu0 0.0
  %379 = vmatprep.subr.mxu0 0.0
  %380 = vmatpush1.msra.mxu0 0.0
  %381 = vmatprep.subr.mxu0 0.0
  %382 = vmatpush1.msra.mxu0 0.0
  %383 = vmatprep.subr.mxu0 0.0
  %384 = vmatpush1.msra.mxu0 0.0
  %385 = vmatprep.subr.mxu0 0.0
  %386 = vmatpush1.msra.mxu0 0.0
  %387 = vmatprep.subr.mxu0 0.0
  %388 = vmatpush1.msra.mxu0 0.0
  %389 = vmatprep.subr.mxu0 0.0
  %390 = vmatpush1.msra.mxu0 0.0
  %391 = vmatprep.subr.mxu0 0.0
  %392 = vmatpush1.msra.mxu0 0.0
  %393 = vmatprep.subr.mxu0 0.0
  %394 = vmatpush1.msra.mxu0 0.0
  %395 = vmatprep.subr.mxu0 0.0
  %396 = vmatpush1.msra.mxu0 0.0
  %397 = vmatprep.subr.mxu0 0.0
  %398 = vmatpush1.msra.mxu0 0.0
  %399 = vmatprep.subr.mxu0 0.0
  %400 = vmatpush1.msra.mxu0 0.0
  %401 = vmatprep.subr.mxu0 0.0
  %402 = vmatpush1.msra.mxu0 0.0
  %403 = vmatprep.subr.mxu0 0.0
  %404 = vmatpush1.msra.mxu0 0.0
  %405 = vmatprep.subr.mxu0 0.0
  %406 = vmatpush1.msra.mxu0 0.0
  %407 = vmatprep.subr.mxu0 0.0
  %408 = vmatpush1.msra.mxu0 0.0
  %409 = vmatprep.subr.mxu0 0.0
  %410 = vmatpush1.msra.mxu0 0.0
  %411 = vmatprep.subr.mxu0 0.0
  %412 = vmatpush1.msra.mxu0 0.0
  %413 = vmatprep.subr.mxu0 0.0
  %414 = vmatpush1.msra.mxu0 0.0
  %415 = vmatprep.subr.mxu0 0.0
  %416 = vmatpush1.msra.mxu0 0.0
  %417 = vmatprep.subr.mxu0 0.0
  %418 = vmatpush1.msra.mxu0 0.0
  %419 = vmatprep.subr.mxu0 0.0
  %420 = vmatpush1.msra.mxu0 0.0
  %421 = vmatprep.subr.mxu0 0.0
  %422 = vmatpush1.msra.mxu0 0.0
  %423 = vmatprep.subr.mxu0 0.0
  %424 = vmatpush1.msra.mxu0 0.0
  %425 = vmatprep.subr.mxu0 0.0
  %426 = vmatpush1.msra.mxu0 0.0
  %427 = vmatprep.subr.mxu0 0.0
  %428 = vmatpush1.msra.mxu0 0.0
  %429 = vmatprep.subr.mxu0 0.0
  %430 = vmatpush1.msra.mxu0 0.0
  %431 = vmatprep.subr.mxu0 0.0
  %432 = vmatpush1.msra.mxu0 0.0
  %433 = vmatprep.subr.mxu0 0.0
  %434 = vmatpush1.msra.mxu0 0.0
  %435 = vmatprep.subr.mxu0 0.0
  %436 = vmatpush1.msra.mxu0 0.0
  %437 = vmatprep.subr.mxu0 0.0
  %438 = vmatpush1.msra.mxu0 0.0
  %439 = vmatprep.mubr.f32.mxu0 0.0
  %440 = vmatmul.mubr.f32.gmra.mrb[0].mxu0 %v216
  %v441 = vpop.f32.mrb[0].mxu0
  %v442 = vadd.f32 %v373, %v441
  %v443 = vpop.f32.mrb[0].mxu0
  %444 = vdwg.mxu0
  %v445 = vmax.f32 %v442, 0.0
  %v446 = vadd.f32 %v445, %v289
  %v448 = vsel %vm294, %v446, 0
  %450 = vmatprep.subr.mxu0 0.0
  %451 = vmatpush1.msra.mxu0 %v290
  %452 = vmatprep.subr.mxu0 0.0
  %453 = vmatpush1.msra.mxu0 %v291
  %454 = vmatprep.subr.mxu0 0.0
  %455 = vmatpush1.msra.mxu0 %v292
  %456 = vmatprep.subr.mxu0 0.0
  %457 = vmatpush1.msra.mxu0 %v293
  %458 = vmatprep.subr.mxu0 0.0
  %459 = vmatpush1.msra.mxu0 0.0
  %460 = vmatprep.subr.mxu0 0.0
  %461 = vmatpush1.msra.mxu0 0.0
  %462 = vmatprep.subr.mxu0 0.0
  %463 = vmatpush1.msra.mxu0 0.0
  %464 = vmatprep.subr.mxu0 0.0
  %465 = vmatpush1.msra.mxu0 0.0
  %466 = vmatprep.subr.mxu0 0.0
  %467 = vmatpush1.msra.mxu0 0.0
  %468 = vmatprep.subr.mxu0 0.0
  %469 = vmatpush1.msra.mxu0 0.0
  %470 = vmatprep.subr.mxu0 0.0
  %471 = vmatpush1.msra.mxu0 0.0
  %472 = vmatprep.subr.mxu0 0.0
  %473 = vmatpush1.msra.mxu0 0.0
  %474 = vmatprep.subr.mxu0 0.0
  %475 = vmatpush1.msra.mxu0 0.0
  %476 = vmatprep.subr.mxu0 0.0
  %477 = vmatpush1.msra.mxu0 0.0
  %478 = vmatprep.subr.mxu0 0.0
  %479 = vmatpush1.msra.mxu0 0.0
  %480 = vmatprep.subr.mxu0 0.0
  %481 = vmatpush1.msra.mxu0 0.0
  %482 = vmatprep.subr.mxu0 0.0
  %483 = vmatpush1.msra.mxu0 0.0
  %484 = vmatprep.subr.mxu0 0.0
  %485 = vmatpush1.msra.mxu0 0.0
  %486 = vmatprep.subr.mxu0 0.0
  %487 = vmatpush1.msra.mxu0 0.0
  %488 = vmatprep.subr.mxu0 0.0
  %489 = vmatpush1.msra.mxu0 0.0
  %490 = vmatprep.subr.mxu0 0.0
  %491 = vmatpush1.msra.mxu0 0.0
  %492 = vmatprep.subr.mxu0 0.0
  %493 = vmatpush1.msra.mxu0 0.0
  %494 = vmatprep.subr.mxu0 0.0
  %495 = vmatpush1.msra.mxu0 0.0
  %496 = vmatprep.subr.mxu0 0.0
  %497 = vmatpush1.msra.mxu0 0.0
  %498 = vmatprep.subr.mxu0 0.0
  %499 = vmatpush1.msra.mxu0 0.0
  %500 = vmatprep.subr.mxu0 0.0
  %501 = vmatpush1.msra.mxu0 0.0
  %502 = vmatprep.subr.mxu0 0.0
  %503 = vmatpush1.msra.mxu0 0.0
  %504 = vmatprep.subr.mxu0 0.0
  %505 = vmatpush1.msra.mxu0 0.0
  %506 = vmatprep.subr.mxu0 0.0
  %507 = vmatpush1.msra.mxu0 0.0
  %508 = vmatprep.subr.mxu0 0.0
  %509 = vmatpush1.msra.mxu0 0.0
  %510 = vmatprep.subr.mxu0 0.0
  %511 = vmatpush1.msra.mxu0 0.0
  %512 = vmatprep.subr.mxu0 0.0
  %513 = vmatpush1.msra.mxu0 0.0
  %514 = vmatprep.mubr.f32.mxu0 0.0
  %515 = vmatmul.mubr.f32.gmra.mrb[0].mxu0 %v448
  %v516 = vpop.f32.mrb[0].mxu0
  %v517 = vadd.f32 0.0, %v516
  %v518 = vpop.f32.mrb[0].mxu0
  %519 = vdwg.mxu0
  %520 = vmatprep.subr.mxu0 0.0
  %521 = vmatpush1.msra.mxu0 %v517
  %522 = vmatprep.subr.mxu0 0.0
  %523 = vmatpush1.msra.mxu0 0.0
  %524 = vmatprep.subr.mxu0 0.0
  %525 = vmatpush1.msra.mxu0 0.0
  %526 = vmatprep.subr.mxu0 0.0
  %527 = vmatpush1.msra.mxu0 0.0
  %528 = vmatprep.subr.mxu0 0.0
  %529 = vmatpush1.msra.mxu0 0.0
  %530 = vmatprep.subr.mxu0 0.0
  %531 = vmatpush1.msra.mxu0 0.0
  %532 = vmatprep.subr.mxu0 0.0
  %533 = vmatpush1.msra.mxu0 0.0
  %534 = vmatprep.subr.mxu0 0.0
  %535 = vmatpush1.msra.mxu0 0.0
  %536 = vmatprep.subr.mxu0 0.0
  %537 = vmatpush1.msra.mxu0 0.0
  %538 = vmatprep.subr.mxu0 0.0
  %539 = vmatpush1.msra.mxu0 0.0
  %540 = vmatprep.subr.mxu0 0.0
  %541 = vmatpush1.msra.mxu0 0.0
  %542 = vmatprep.subr.mxu0 0.0
  %543 = vmatpush1.msra.mxu0 0.0
  %544 = vmatprep.subr.mxu0 0.0
  %545 = vmatpush1.msra.mxu0 0.0
  %546 = vmatprep.subr.mxu0 0.0
  %547 = vmatpush1.msra.mxu0 0.0
  %548 = vmatprep.subr.mxu0 0.0
  %549 = vmatpush1.msra.mxu0 0.0
  %550 = vmatprep.subr.mxu0 0.0
  %551 = vmatpush1.msra.mxu0 0.0
  %552 = vmatprep.subr.mxu0 0.0
  %553 = vmatpush1.msra.mxu0 0.0
  %554 = vmatprep.subr.mxu0 0.0
  %555 = vmatpush1.msra.mxu0 0.0
  %556 = vmatprep.subr.mxu0 0.0
  %557 = vmatpush1.msra.mxu0 0.0
  %558 = vmatprep.subr.mxu0 0.0
  %559 = vmatpush1.msra.mxu0 0.0
  %560 = vmatprep.subr.mxu0 0.0
  %561 = vmatpush1.msra.mxu0 0.0
  %562 = vmatprep.subr.mxu0 0.0
  %563 = vmatpush1.msra.mxu0 0.0
  %564 = vmatprep.subr.mxu0 0.0
  %565 = vmatpush1.msra.mxu0 0.0
  %566 = vmatprep.subr.mxu0 0.0
  %567 = vmatpush1.msra.mxu0 0.0
  %568 = vmatprep.subr.mxu0 0.0
  %569 = vmatpush1.msra.mxu0 0.0
  %570 = vmatprep.subr.mxu0 0.0
  %571 = vmatpush1.msra.mxu0 0.0
  %572 = vmatprep.subr.mxu0 0.0
  %573 = vmatpush1.msra.mxu0 0.0
  %574 = vmatprep.subr.mxu0 0.0
  %575 = vmatpush1.msra.mxu0 0.0
  %576 = vmatprep.subr.mxu0 0.0
  %577 = vmatpush1.msra.mxu0 0.0
  %578 = vmatprep.subr.mxu0 0.0
  %579 = vmatpush1.msra.mxu0 0.0
  %580 = vmatprep.subr.mxu0 0.0
  %581 = vmatpush1.msra.mxu0 0.0
  %582 = vmatprep.subr.mxu0 0.0
  %583 = vmatpush1.msra.mxu0 0.0
  %584 = vmatprep.mubr.f32.mxu0 0.0
  %585 = vmatmul.mubr.f32.gmra.mrb[0].mxu0 %v216
  %v586 = vpop.f32.mrb[0].mxu0
  %v587 = vadd.f32 %v373, %v586
  %v588 = vpop.f32.mrb[0].mxu0
  %589 = vdwg.mxu0
  %v590 = vmax.f32 %v587, 0.0
  %v591 = vadd.f32 %v590, %v446
  %v592 = vld [vmem:[%s8] sm:$0xff]
  %v593 = vld [vmem:[%s8 + $0x8] sm:$0xff]
  %v594 = vld [vmem:[%s8 + $0x10] sm:$0xff]
  %v595 = vld [vmem:[%s8 + $0x18] sm:$0xff]
  %v597 = vsel %vm294, %v591, 0
  %599 = vmatprep.subr.mxu0 0.0
  %600 = vmatpush1.msra.mxu0 %v592
  %601 = vmatprep.subr.mxu0 0.0
  %602 = vmatpush1.msra.mxu0 %v593
  %603 = vmatprep.subr.mxu0 0.0
  %604 = vmatpush1.msra.mxu0 %v594
  %605 = vmatprep.subr.mxu0 0.0
  %606 = vmatpush1.msra.mxu0 %v595
  %607 = vmatprep.subr.mxu0 0.0
  %608 = vmatpush1.msra.mxu0 0.0
  %609 = vmatprep.subr.mxu0 0.0
  %610 = vmatpush1.msra.mxu0 0.0
  %611 = vmatprep.subr.mxu0 0.0
  %612 = vmatpush1.msra.mxu0 0.0
  %613 = vmatprep.subr.mxu0 0.0
  %614 = vmatpush1.msra.mxu0 0.0
  %615 = vmatprep.subr.mxu0 0.0
  %616 = vmatpush1.msra.mxu0 0.0
  %617 = vmatprep.subr.mxu0 0.0
  %618 = vmatpush1.msra.mxu0 0.0
  %619 = vmatprep.subr.mxu0 0.0
  %620 = vmatpush1.msra.mxu0 0.0
  %621 = vmatprep.subr.mxu0 0.0
  %622 = vmatpush1.msra.mxu0 0.0
  %623 = vmatprep.subr.mxu0 0.0
  %624 = vmatpush1.msra.mxu0 0.0
  %625 = vmatprep.subr.mxu0 0.0
  %626 = vmatpush1.msra.mxu0 0.0
  %627 = vmatprep.subr.mxu0 0.0
  %628 = vmatpush1.msra.mxu0 0.0
  %629 = vmatprep.subr.mxu0 0.0
  %630 = vmatpush1.msra.mxu0 0.0
  %631 = vmatprep.subr.mxu0 0.0
  %632 = vmatpush1.msra.mxu0 0.0
  %633 = vmatprep.subr.mxu0 0.0
  %634 = vmatpush1.msra.mxu0 0.0
  %635 = vmatprep.subr.mxu0 0.0
  %636 = vmatpush1.msra.mxu0 0.0
  %637 = vmatprep.subr.mxu0 0.0
  %638 = vmatpush1.msra.mxu0 0.0
  %639 = vmatprep.subr.mxu0 0.0
  %640 = vmatpush1.msra.mxu0 0.0
  %641 = vmatprep.subr.mxu0 0.0
  %642 = vmatpush1.msra.mxu0 0.0
  %643 = vmatprep.subr.mxu0 0.0
  %644 = vmatpush1.msra.mxu0 0.0
  %645 = vmatprep.subr.mxu0 0.0
  %646 = vmatpush1.msra.mxu0 0.0
  %647 = vmatprep.subr.mxu0 0.0
  %648 = vmatpush1.msra.mxu0 0.0
  %649 = vmatprep.subr.mxu0 0.0
  %650 = vmatpush1.msra.mxu0 0.0
  %651 = vmatprep.subr.mxu0 0.0
  %652 = vmatpush1.msra.mxu0 0.0
  %653 = vmatprep.subr.mxu0 0.0
  %654 = vmatpush1.msra.mxu0 0.0
  %655 = vmatprep.subr.mxu0 0.0
  %656 = vmatpush1.msra.mxu0 0.0
  %657 = vmatprep.subr.mxu0 0.0
  %658 = vmatpush1.msra.mxu0 0.0
  %659 = vmatprep.subr.mxu0 0.0
  %660 = vmatpush1.msra.mxu0 0.0
  %661 = vmatprep.subr.mxu0 0.0
  %662 = vmatpush1.msra.mxu0 0.0
  %663 = vmatprep.mubr.f32.mxu0 0.0
  %664 = vmatmul.mubr.f32.gmra.mrb[0].mxu0 %v597
  %v665 = vpop.f32.mrb[0].mxu0
  %v666 = vadd.f32 0.0, %v665
  %v667 = vpop.f32.mrb[0].mxu0
  %668 = vdwg.mxu0
  %v669 = vld [vmem:[%s9] sm:$0x1]
  %v671 = vlaneseq
  %v672 = vshrl.u32 %v671, 7
  %v673 = vsub.s32 0, %v672
  %v674 = vrot.slane %v669, %v673
  %676 = vmatprep.subr.mxu0 0.0
  %677 = vmatpush1.msra.mxu0 %v666
  %678 = vmatprep.subr.mxu0 0.0
  %679 = vmatpush1.msra.mxu0 0.0
  %680 = vmatprep.subr.mxu0 0.0
  %681 = vmatpush1.msra.mxu0 0.0
  %682 = vmatprep.subr.mxu0 0.0
  %683 = vmatpush1.msra.mxu0 0.0
  %684 = vmatprep.subr.mxu0 0.0
  %685 = vmatpush1.msra.mxu0 0.0
  %686 = vmatprep.subr.mxu0 0.0
  %687 = vmatpush1.msra.mxu0 0.0
  %688 = vmatprep.subr.mxu0 0.0
  %689 = vmatpush1.msra.mxu0 0.0
  %690 = vmatprep.subr.mxu0 0.0
  %691 = vmatpush1.msra.mxu0 0.0
  %692 = vmatprep.subr.mxu0 0.0
  %693 = vmatpush1.msra.mxu0 0.0
  %694 = vmatprep.subr.mxu0 0.0
  %695 = vmatpush1.msra.mxu0 0.0
  %696 = vmatprep.subr.mxu0 0.0
  %697 = vmatpush1.msra.mxu0 0.0
  %698 = vmatprep.subr.mxu0 0.0
  %699 = vmatpush1.msra.mxu0 0.0
  %700 = vmatprep.subr.mxu0 0.0
  %701 = vmatpush1.msra.mxu0 0.0
  %702 = vmatprep.subr.mxu0 0.0
  %703 = vmatpush1.msra.mxu0 0.0
  %704 = vmatprep.subr.mxu0 0.0
  %705 = vmatpush1.msra.mxu0 0.0
  %706 = vmatprep.subr.mxu0 0.0
  %707 = vmatpush1.msra.mxu0 0.0
  %708 = vmatprep.subr.mxu0 0.0
  %709 = vmatpush1.msra.mxu0 0.0
  %710 = vmatprep.subr.mxu0 0.0
  %711 = vmatpush1.msra.mxu0 0.0
  %712 = vmatprep.subr.mxu0 0.0
  %713 = vmatpush1.msra.mxu0 0.0
  %714 = vmatprep.subr.mxu0 0.0
  %715 = vmatpush1.msra.mxu0 0.0
  %716 = vmatprep.subr.mxu0 0.0
  %717 = vmatpush1.msra.mxu0 0.0
  %718 = vmatprep.subr.mxu0 0.0
  %719 = vmatpush1.msra.mxu0 0.0
  %720 = vmatprep.subr.mxu0 0.0
  %721 = vmatpush1.msra.mxu0 0.0
  %722 = vmatprep.subr.mxu0 0.0
  %723 = vmatpush1.msra.mxu0 0.0
  %724 = vmatprep.subr.mxu0 0.0
  %725 = vmatpush1.msra.mxu0 0.0
  %726 = vmatprep.subr.mxu0 0.0
  %727 = vmatpush1.msra.mxu0 0.0
  %728 = vmatprep.subr.mxu0 0.0
  %729 = vmatpush1.msra.mxu0 0.0
  %730 = vmatprep.subr.mxu0 0.0
  %731 = vmatpush1.msra.mxu0 0.0
  %732 = vmatprep.subr.mxu0 0.0
  %733 = vmatpush1.msra.mxu0 0.0
  %734 = vmatprep.subr.mxu0 0.0
  %735 = vmatpush1.msra.mxu0 0.0
  %736 = vmatprep.subr.mxu0 0.0
  %737 = vmatpush1.msra.mxu0 0.0
  %738 = vmatprep.subr.mxu0 0.0
  %739 = vmatpush1.msra.mxu0 0.0
  %740 = vmatprep.mubr.f32.mxu0 0.0
  %741 = vmatmul.mubr.f32.gmra.mrb[0].mxu0 %v216
  %v742 = vpop.f32.mrb[0].mxu0
  %v743 = vadd.f32 %v674, %v742
  %v744 = vpop.f32.mrb[0].mxu0
  %745 = vdwg.mxu0
  %v746 = vmax.f32 %v743, 0.0
  %v747 = vadd.f32 %v746, %v591
  %v748 = vld [vmem:[%s10] sm:$0xff]
  %v749 = vld [vmem:[%s10 + $0x8] sm:$0xff]
  %v750 = vld [vmem:[%s10 + $0x10] sm:$0xff]
  %v751 = vld [vmem:[%s10 + $0x18] sm:$0xff]
  %v752 = vld [vmem:[%s11] sm:$0xff]
  %v753 = vld [vmem:[%s11 + $0x8] sm:$0xff]
  %v754 = vld [vmem:[%s11 + $0x10] sm:$0xff]
  %v755 = vld [vmem:[%s11 + $0x18] sm:$0xff]
  %756 = vmatprep.subr.mxu0 0.0
  %757 = vmatpush1.msra.mxu0 %v752
  %758 = vmatprep.subr.mxu0 0.0
  %759 = vmatpush1.msra.mxu0 %v753
  %760 = vmatprep.subr.mxu0 0.0
  %761 = vmatpush1.msra.mxu0 %v754
  %762 = vmatprep.subr.mxu0 0.0
  %763 = vmatpush1.msra.mxu0 %v755
  %764 = vmatprep.subr.mxu0 0.0
  %765 = vmatpush1.msra.mxu0 0.0
  %766 = vmatprep.subr.mxu0 0.0
  %767 = vmatpush1.msra.mxu0 0.0
  %768 = vmatprep.subr.mxu0 0.0
  %769 = vmatpush1.msra.mxu0 0.0
  %770 = vmatprep.subr.mxu0 0.0
  %771 = vmatpush1.msra.mxu0 0.0
  %772 = vmatprep.subr.mxu0 0.0
  %773 = vmatpush1.msra.mxu0 0.0
  %774 = vmatprep.subr.mxu0 0.0
  %775 = vmatpush1.msra.mxu0 0.0
  %776 = vmatprep.subr.mxu0 0.0
  %777 = vmatpush1.msra.mxu0 0.0
  %778 = vmatprep.subr.mxu0 0.0
  %779 = vmatpush1.msra.mxu0 0.0
  %780 = vmatprep.subr.mxu0 0.0
  %781 = vmatpush1.msra.mxu0 0.0
  %782 = vmatprep.subr.mxu0 0.0
  %783 = vmatpush1.msra.mxu0 0.0
  %784 = vmatprep.subr.mxu0 0.0
  %785 = vmatpush1.msra.mxu0 0.0
  %786 = vmatprep.subr.mxu0 0.0
  %787 = vmatpush1.msra.mxu0 0.0
  %788 = vmatprep.subr.mxu0 0.0
  %789 = vmatpush1.msra.mxu0 0.0
  %790 = vmatprep.subr.mxu0 0.0
  %791 = vmatpush1.msra.mxu0 0.0
  %792 = vmatprep.subr.mxu0 0.0
  %793 = vmatpush1.msra.mxu0 0.0
  %794 = vmatprep.subr.mxu0 0.0
  %795 = vmatpush1.msra.mxu0 0.0
  %796 = vmatprep.subr.mxu0 0.0
  %797 = vmatpush1.msra.mxu0 0.0
  %798 = vmatprep.subr.mxu0 0.0
  %799 = vmatpush1.msra.mxu0 0.0
  %800 = vmatprep.subr.mxu0 0.0
  %801 = vmatpush1.msra.mxu0 0.0
  %802 = vmatprep.subr.mxu0 0.0
  %803 = vmatpush1.msra.mxu0 0.0
  %804 = vmatprep.subr.mxu0 0.0
  %805 = vmatpush1.msra.mxu0 0.0
  %806 = vmatprep.subr.mxu0 0.0
  %807 = vmatpush1.msra.mxu0 0.0
  %808 = vmatprep.subr.mxu0 0.0
  %809 = vmatpush1.msra.mxu0 0.0
  %810 = vmatprep.subr.mxu0 0.0
  %811 = vmatpush1.msra.mxu0 0.0
  %812 = vmatprep.subr.mxu0 0.0
  %813 = vmatpush1.msra.mxu0 0.0
  %814 = vmatprep.subr.mxu0 0.0
  %815 = vmatpush1.msra.mxu0 0.0
  %816 = vmatprep.subr.mxu0 0.0
  %817 = vmatpush1.msra.mxu0 0.0
  %818 = vmatprep.subr.mxu0 0.0
  %819 = vmatpush1.msra.mxu0 0.0
  %820 = vmatprep.mubr.f32.mxu0 0.0
  %821 = vmatmul.mubr.f32.gmra.mrb[0].mxu0 %v597
  %v822 = vpop.f32.mrb[0].mxu0
  %v823 = vadd.f32 0.0, %v822
  %v824 = vpop.f32.mrb[0].mxu0
  %825 = vdwg.mxu0
  %v827 = vsel %vm294, %v747, 0
  %829 = vmatprep.subr.mxu0 0.0
  %830 = vmatpush1.msra.mxu0 %v748
  %831 = vmatprep.subr.mxu0 0.0
  %832 = vmatpush1.msra.mxu0 %v749
  %833 = vmatprep.subr.mxu0 0.0
  %834 = vmatpush1.msra.mxu0 %v750
  %835 = vmatprep.subr.mxu0 0.0
  %836 = vmatpush1.msra.mxu0 %v751
  %837 = vmatprep.subr.mxu0 0.0
  %838 = vmatpush1.msra.mxu0 0.0
  %839 = vmatprep.subr.mxu0 0.0
  %840 = vmatpush1.msra.mxu0 0.0
  %841 = vmatprep.subr.mxu0 0.0
  %842 = vmatpush1.msra.mxu0 0.0
  %843 = vmatprep.subr.mxu0 0.0
  %844 = vmatpush1.msra.mxu0 0.0
  %845 = vmatprep.subr.mxu0 0.0
  %846 = vmatpush1.msra.mxu0 0.0
  %847 = vmatprep.subr.mxu0 0.0
  %848 = vmatpush1.msra.mxu0 0.0
  %849 = vmatprep.subr.mxu0 0.0
  %850 = vmatpush1.msra.mxu0 0.0
  %851 = vmatprep.subr.mxu0 0.0
  %852 = vmatpush1.msra.mxu0 0.0
  %853 = vmatprep.subr.mxu0 0.0
  %854 = vmatpush1.msra.mxu0 0.0
  %855 = vmatprep.subr.mxu0 0.0
  %856 = vmatpush1.msra.mxu0 0.0
  %857 = vmatprep.subr.mxu0 0.0
  %858 = vmatpush1.msra.mxu0 0.0
  %859 = vmatprep.subr.mxu0 0.0
  %860 = vmatpush1.msra.mxu0 0.0
  %861 = vmatprep.subr.mxu0 0.0
  %862 = vmatpush1.msra.mxu0 0.0
  %863 = vmatprep.subr.mxu0 0.0
  %864 = vmatpush1.msra.mxu0 0.0
  %865 = vmatprep.subr.mxu0 0.0
  %866 = vmatpush1.msra.mxu0 0.0
  %867 = vmatprep.subr.mxu0 0.0
  %868 = vmatpush1.msra.mxu0 0.0
  %869 = vmatprep.subr.mxu0 0.0
  %870 = vmatpush1.msra.mxu0 0.0
  %871 = vmatprep.subr.mxu0 0.0
  %872 = vmatpush1.msra.mxu0 0.0
  %873 = vmatprep.subr.mxu0 0.0
  %874 = vmatpush1.msra.mxu0 0.0
  %875 = vmatprep.subr.mxu0 0.0
  %876 = vmatpush1.msra.mxu0 0.0
  %877 = vmatprep.subr.mxu0 0.0
  %878 = vmatpush1.msra.mxu0 0.0
  %879 = vmatprep.subr.mxu0 0.0
  %880 = vmatpush1.msra.mxu0 0.0
  %881 = vmatprep.subr.mxu0 0.0
  %882 = vmatpush1.msra.mxu0 0.0
  %883 = vmatprep.subr.mxu0 0.0
  %884 = vmatpush1.msra.mxu0 0.0
  %885 = vmatprep.subr.mxu0 0.0
  %886 = vmatpush1.msra.mxu0 0.0
  %887 = vmatprep.subr.mxu0 0.0
  %888 = vmatpush1.msra.mxu0 0.0
  %889 = vmatprep.subr.mxu0 0.0
  %890 = vmatpush1.msra.mxu0 0.0
  %891 = vmatprep.subr.mxu0 0.0
  %892 = vmatpush1.msra.mxu0 0.0
  %893 = vmatprep.mubr.f32.mxu0 0.0
  %894 = vmatmul.mubr.f32.gmra.mrb[0].mxu0 %v827
  %v895 = vpop.f32.mrb[0].mxu0
  %v896 = vadd.f32 %v823, %v895
  %v897 = vpop.f32.mrb[0].mxu0
  %898 = vdwg.mxu0
  %v899 = vld [vmem:[%s12] sm:$0xff]
  %v900 = vld [vmem:[%s12 + $0x8] sm:$0xff]
  %v901 = vld [vmem:[%s12 + $0x10] sm:$0xff]
  %v902 = vld [vmem:[%s12 + $0x18] sm:$0xff]
  %903 = vmatprep.subr.mxu0 0.0
  %904 = vmatpush1.msra.mxu0 %v899
  %905 = vmatprep.subr.mxu0 0.0
  %906 = vmatpush1.msra.mxu0 %v900
  %907 = vmatprep.subr.mxu0 0.0
  %908 = vmatpush1.msra.mxu0 %v901
  %909 = vmatprep.subr.mxu0 0.0
  %910 = vmatpush1.msra.mxu0 %v902
  %911 = vmatprep.subr.mxu0 0.0
  %912 = vmatpush1.msra.mxu0 0.0
  %913 = vmatprep.subr.mxu0 0.0
  %914 = vmatpush1.msra.mxu0 0.0
  %915 = vmatprep.subr.mxu0 0.0
  %916 = vmatpush1.msra.mxu0 0.0
  %917 = vmatprep.subr.mxu0 0.0
  %918 = vmatpush1.msra.mxu0 0.0
  %919 = vmatprep.subr.mxu0 0.0
  %920 = vmatpush1.msra.mxu0 0.0
  %921 = vmatprep.subr.mxu0 0.0
  %922 = vmatpush1.msra.mxu0 0.0
  %923 = vmatprep.subr.mxu0 0.0
  %924 = vmatpush1.msra.mxu0 0.0
  %925 = vmatprep.subr.mxu0 0.0
  %926 = vmatpush1.msra.mxu0 0.0
  %927 = vmatprep.subr.mxu0 0.0
  %928 = vmatpush1.msra.mxu0 0.0
  %929 = vmatprep.subr.mxu0 0.0
  %930 = vmatpush1.msra.mxu0 0.0
  %931 = vmatprep.subr.mxu0 0.0
  %932 = vmatpush1.msra.mxu0 0.0
  %933 = vmatprep.subr.mxu0 0.0
  %934 = vmatpush1.msra.mxu0 0.0
  %935 = vmatprep.subr.mxu0 0.0
  %936 = vmatpush1.msra.mxu0 0.0
  %937 = vmatprep.subr.mxu0 0.0
  %938 = vmatpush1.msra.mxu0 0.0
  %939 = vmatprep.subr.mxu0 0.0
  %940 = vmatpush1.msra.mxu0 0.0
  %941 = vmatprep.subr.mxu0 0.0
  %942 = vmatpush1.msra.mxu0 0.0
  %943 = vmatprep.subr.mxu0 0.0
  %944 = vmatpush1.msra.mxu0 0.0
  %945 = vmatprep.subr.mxu0 0.0
  %946 = vmatpush1.msra.mxu0 0.0
  %947 = vmatprep.subr.mxu0 0.0
  %948 = vmatpush1.msra.mxu0 0.0
  %949 = vmatprep.subr.mxu0 0.0
  %950 = vmatpush1.msra.mxu0 0.0
  %951 = vmatprep.subr.mxu0 0.0
  %952 = vmatpush1.msra.mxu0 0.0
  %953 = vmatprep.subr.mxu0 0.0
  %954 = vmatpush1.msra.mxu0 0.0
  %955 = vmatprep.subr.mxu0 0.0
  %956 = vmatpush1.msra.mxu0 0.0
  %957 = vmatprep.subr.mxu0 0.0
  %958 = vmatpush1.msra.mxu0 0.0
  %959 = vmatprep.subr.mxu0 0.0
  %960 = vmatpush1.msra.mxu0 0.0
  %961 = vmatprep.subr.mxu0 0.0
  %962 = vmatpush1.msra.mxu0 0.0
  %963 = vmatprep.subr.mxu0 0.0
  %964 = vmatpush1.msra.mxu0 0.0
  %965 = vmatprep.subr.mxu0 0.0
  %966 = vmatpush1.msra.mxu0 0.0
  %967 = vmatprep.mubr.f32.mxu0 0.0
  %968 = vmatmul.mubr.f32.gmra.mrb[0].mxu0 %v448
  %v969 = vpop.f32.mrb[0].mxu0
  %v970 = vadd.f32 0.0, %v969
  %v971 = vpop.f32.mrb[0].mxu0
  %972 = vdwg.mxu0
  %v973 = vadd.f32 %v896, %v970
  %v974 = vld [vmem:[%s13] sm:$0xff]
  %v975 = vld [vmem:[%s13 + $0x8] sm:$0xff]
  %v976 = vld [vmem:[%s13 + $0x10] sm:$0xff]
  %v977 = vld [vmem:[%s13 + $0x18] sm:$0xff]
  %978 = vmatprep.subr.mxu0 0.0
  %979 = vmatpush1.msra.mxu0 %v974
  %980 = vmatprep.subr.mxu0 0.0
  %981 = vmatpush1.msra.mxu0 %v975
  %982 = vmatprep.subr.mxu0 0.0
  %983 = vmatpush1.msra.mxu0 %v976
  %984 = vmatprep.subr.mxu0 0.0
  %985 = vmatpush1.msra.mxu0 %v977
  %986 = vmatprep.subr.mxu0 0.0
  %987 = vmatpush1.msra.mxu0 0.0
  %988 = vmatprep.subr.mxu0 0.0
  %989 = vmatpush1.msra.mxu0 0.0
  %990 = vmatprep.subr.mxu0 0.0
  %991 = vmatpush1.msra.mxu0 0.0
  %992 = vmatprep.subr.mxu0 0.0
  %993 = vmatpush1.msra.mxu0 0.0
  %994 = vmatprep.subr.mxu0 0.0
  %995 = vmatpush1.msra.mxu0 0.0
  %996 = vmatprep.subr.mxu0 0.0
  %997 = vmatpush1.msra.mxu0 0.0
  %998 = vmatprep.subr.mxu0 0.0
  %999 = vmatpush1.msra.mxu0 0.0
  %1000 = vmatprep.subr.mxu0 0.0
  %1001 = vmatpush1.msra.mxu0 0.0
  %1002 = vmatprep.subr.mxu0 0.0
  %1003 = vmatpush1.msra.mxu0 0.0
  %1004 = vmatprep.subr.mxu0 0.0
  %1005 = vmatpush1.msra.mxu0 0.0
  %1006 = vmatprep.subr.mxu0 0.0
  %1007 = vmatpush1.msra.mxu0 0.0
  %1008 = vmatprep.subr.mxu0 0.0
  %1009 = vmatpush1.msra.mxu0 0.0
  %1010 = vmatprep.subr.mxu0 0.0
  %1011 = vmatpush1.msra.mxu0 0.0
  %1012 = vmatprep.subr.mxu0 0.0
  %1013 = vmatpush1.msra.mxu0 0.0
  %1014 = vmatprep.subr.mxu0 0.0
  %1015 = vmatpush1.msra.mxu0 0.0
  %1016 = vmatprep.subr.mxu0 0.0
  %1017 = vmatpush1.msra.mxu0 0.0
  %1018 = vmatprep.subr.mxu0 0.0
  %1019 = vmatpush1.msra.mxu0 0.0
  %1020 = vmatprep.subr.mxu0 0.0
  %1021 = vmatpush1.msra.mxu0 0.0
  %1022 = vmatprep.subr.mxu0 0.0
  %1023 = vmatpush1.msra.mxu0 0.0
  %1024 = vmatprep.subr.mxu0 0.0
  %1025 = vmatpush1.msra.mxu0 0.0
  %1026 = vmatprep.subr.mxu0 0.0
  %1027 = vmatpush1.msra.mxu0 0.0
  %1028 = vmatprep.subr.mxu0 0.0
  %1029 = vmatpush1.msra.mxu0 0.0
  %1030 = vmatprep.subr.mxu0 0.0
  %1031 = vmatpush1.msra.mxu0 0.0
  %1032 = vmatprep.subr.mxu0 0.0
  %1033 = vmatpush1.msra.mxu0 0.0
  %1034 = vmatprep.subr.mxu0 0.0
  %1035 = vmatpush1.msra.mxu0 0.0
  %1036 = vmatprep.subr.mxu0 0.0
  %1037 = vmatpush1.msra.mxu0 0.0
  %1038 = vmatprep.subr.mxu0 0.0
  %1039 = vmatpush1.msra.mxu0 0.0
  %1040 = vmatprep.subr.mxu0 0.0
  %1041 = vmatpush1.msra.mxu0 0.0
  %1042 = vmatprep.mubr.f32.mxu0 0.0
  %1043 = vmatmul.mubr.f32.gmra.mrb[0].mxu0 %v296
  %v1044 = vpop.f32.mrb[0].mxu0
  %v1045 = vadd.f32 0.0, %v1044
  %v1046 = vpop.f32.mrb[0].mxu0
  %1047 = vdwg.mxu0
  %v1048 = vadd.f32 %v973, %v1045
  %v1049 = vld [vmem:[%s14] sm:$0x1]
  %v1051 = vlaneseq
  %v1052 = vshrl.u32 %v1051, 7
  %v1053 = vsub.s32 0, %v1052
  %v1054 = vrot.slane %v1049, %v1053
  %1056 = vmatprep.subr.mxu0 0.0
  %1057 = vmatpush1.msra.mxu0 %v1048
  %1058 = vmatprep.subr.mxu0 0.0
  %1059 = vmatpush1.msra.mxu0 0.0
  %1060 = vmatprep.subr.mxu0 0.0
  %1061 = vmatpush1.msra.mxu0 0.0
  %1062 = vmatprep.subr.mxu0 0.0
  %1063 = vmatpush1.msra.mxu0 0.0
  %1064 = vmatprep.subr.mxu0 0.0
  %1065 = vmatpush1.msra.mxu0 0.0
  %1066 = vmatprep.subr.mxu0 0.0
  %1067 = vmatpush1.msra.mxu0 0.0
  %1068 = vmatprep.subr.mxu0 0.0
  %1069 = vmatpush1.msra.mxu0 0.0
  %1070 = vmatprep.subr.mxu0 0.0
  %1071 = vmatpush1.msra.mxu0 0.0
  %1072 = vmatprep.subr.mxu0 0.0
  %1073 = vmatpush1.msra.mxu0 0.0
  %1074 = vmatprep.subr.mxu0 0.0
  %1075 = vmatpush1.msra.mxu0 0.0
  %1076 = vmatprep.subr.mxu0 0.0
  %1077 = vmatpush1.msra.mxu0 0.0
  %1078 = vmatprep.subr.mxu0 0.0
  %1079 = vmatpush1.msra.mxu0 0.0
  %1080 = vmatprep.subr.mxu0 0.0
  %1081 = vmatpush1.msra.mxu0 0.0
  %1082 = vmatprep.subr.mxu0 0.0
  %1083 = vmatpush1.msra.mxu0 0.0
  %1084 = vmatprep.subr.mxu0 0.0
  %1085 = vmatpush1.msra.mxu0 0.0
  %1086 = vmatprep.subr.mxu0 0.0
  %1087 = vmatpush1.msra.mxu0 0.0
  %1088 = vmatprep.subr.mxu0 0.0
  %1089 = vmatpush1.msra.mxu0 0.0
  %1090 = vmatprep.subr.mxu0 0.0
  %1091 = vmatpush1.msra.mxu0 0.0
  %1092 = vmatprep.subr.mxu0 0.0
  %1093 = vmatpush1.msra.mxu0 0.0
  %1094 = vmatprep.subr.mxu0 0.0
  %1095 = vmatpush1.msra.mxu0 0.0
  %1096 = vmatprep.subr.mxu0 0.0
  %1097 = vmatpush1.msra.mxu0 0.0
  %1098 = vmatprep.subr.mxu0 0.0
  %1099 = vmatpush1.msra.mxu0 0.0
  %1100 = vmatprep.subr.mxu0 0.0
  %1101 = vmatpush1.msra.mxu0 0.0
  %1102 = vmatprep.subr.mxu0 0.0
  %1103 = vmatpush1.msra.mxu0 0.0
  %1104 = vmatprep.subr.mxu0 0.0
  %1105 = vmatpush1.msra.mxu0 0.0
  %1106 = vmatprep.subr.mxu0 0.0
  %1107 = vmatpush1.msra.mxu0 0.0
  %1108 = vmatprep.subr.mxu0 0.0
  %1109 = vmatpush1.msra.mxu0 0.0
  %1110 = vmatprep.subr.mxu0 0.0
  %1111 = vmatpush1.msra.mxu0 0.0
  %1112 = vmatprep.subr.mxu0 0.0
  %1113 = vmatpush1.msra.mxu0 0.0
  %1114 = vmatprep.subr.mxu0 0.0
  %1115 = vmatpush1.msra.mxu0 0.0
  %1116 = vmatprep.subr.mxu0 0.0
  %1117 = vmatpush1.msra.mxu0 0.0
  %1118 = vmatprep.subr.mxu0 0.0
  %1119 = vmatpush1.msra.mxu0 0.0
  %1120 = vmatprep.mubr.f32.mxu0 0.0
  %1121 = vmatmul.mubr.f32.gmra.mrb[0].mxu0 %v216
  %v1122 = vpop.f32.mrb[0].mxu0
  %v1123 = vadd.f32 %v1054, %v1122
  %v1124 = vpop.f32.mrb[0].mxu0
  %1125 = vdwg.mxu0
  %vm1126 = vcmask 31744
  %v1127 = vsel %vm1126, %v1123, -inf
  %1128 = vmax.xlane.f32.xlu0 %v1127
  %v1129 = vpop.xlane.xlu0 %1128
  %v1130 = vsub.f32 %v1123, %v1129
  %v1131 = vmul.f32 %v1130, 1.442695
  %v1132 = vpow.pop %v1131
  %v1133 = vsel %vm1126, %v1132, 0.0
  %1134 = vadd.xlane.f32.xlu0 %v1133
  %v1135 = vpop.xlane.xlu0 %1134
  %v1136 = vlog2.pop %v1135
  %v1137 = vmul.f32 %v1136, 0.6931472
  %v1138 = vsub.f32 %v1130, %v1137
  %1139 = vst.msk [vmem:[%s15] sm:$0xff] %vm1126, %v1138
  // Predicated region
  $region62: #{tpu_custom_call.1} parent=0 // pred_check
    _
  $region63: #{tpu_custom_call.1} parent=0 // pred_check_branch
    %1141 = sbr.rel (0) target = $region65
  $region64: #{tpu_custom_call.1} parent=0 // pred_region
    _
  $region65: #{tpu_custom_call.1} parent=0 // pred_fallthru
    _
  // Predicated region
  $region66: #{tpu_custom_call.1} parent=0 // pred_check
    _
  $region67: #{tpu_custom_call.1} parent=0 // pred_check_branch
    %1143 = sbr.rel (0) target = $region69
  $region68: #{tpu_custom_call.1} parent=0 // pred_region
    _
  $region69: #{tpu_custom_call.1} parent=0 // pred_fallthru
    _

</llo_original>
